<compile_context>
chip_gen: v5e
topology: v5e:2x2
jax: 0.10.0
libtpu: 0.0.40
codegen_flags: <defaults>
</compile_context>

<pallas_src>
import functools

import jax
import jax.numpy as jnp
import numpy as np
from jax.experimental import pallas as pl
from jax.experimental.pallas import tpu as pltpu

_LANES = 128
_VMEM_BUDGET_BYTES = 12 * 1024 * 1024   # fits v5e's 16 MiB scoped-VMEM default


def _round_down(x, m):
    return (x // m) * m


def _softplus(d):
    # lse - s_y == softplus(s_other - s_y); stable form, 1 exp + 1 log1p.
    return jnp.maximum(d, 0.0) + jnp.log1p(jnp.exp(-jnp.abs(d)))


def _gspade_loss_kernel(s_ref, y_ref, num_ref, cnt_ref, acc_num, acc_cnt,
                        *, w0, w1, hw, block_r, block_l, n_inner, need_mask):
    i = pl.program_id(2)

    @pl.when(i == 0)
    def _():
        acc_num[...] = jnp.zeros_like(acc_num)
        acc_cnt[...] = jnp.zeros_like(acc_cnt)

    # Dense (R, 128) planes; bf16 scores cast to f32 here, labels stay narrow.
    s0 = s_ref[0, 0].astype(jnp.float32)
    s1 = s_ref[0, 1].astype(jnp.float32)
    y = y_ref[0]
    is_one = (y == 1)

    s_y = jnp.where(is_one, s1, s0)
    s_o = jnp.where(is_one, s0, s1)
    w_y = jnp.where(is_one, jnp.float32(w1), jnp.float32(w0))

    nll = _softplus(s_o - s_y)

    if need_mask:
        # Mask positions past the dense prefix (ragged last row block and the
        # phantom tile introduced by the outer/inner split).  Keep the mask as
        # the LAST op so garbage reads from padded blocks never leak through.
        t = pl.program_id(1) * n_inner + i                 # logical (unclamped) tile
        r_idx = jax.lax.broadcasted_iota(jnp.int32, (block_r, block_l), 0)
        l_idx = jax.lax.broadcasted_iota(jnp.int32, (block_r, block_l), 1)
        pos = t * (block_r * block_l) + r_idx * block_l + l_idx
        valid = pos < hw
        num_part = jnp.where(valid, w_y * nll, jnp.float32(0.0))
        cnt_part = jnp.where(valid & is_one, jnp.float32(1.0), jnp.float32(0.0))
    else:
        num_part = w_y * nll
        cnt_part = is_one.astype(jnp.float32)

    # Per-lane partial sums; the single cross-lane reduce happens in the epilogue.
    acc_num[...] += num_part
    acc_cnt[...] += cnt_part

    @pl.when(i == n_inner - 1)
    def _():
        num_ref[...] = jnp.sum(acc_num[...]).reshape(1, 1, 1, 1)
        cnt_ref[...] = jnp.sum(acc_cnt[...]).reshape(1, 1, 1, 1)


def _reference_loss(scores, labels, no_prob, yes_prob):
    """Pure-JAX replica of nn.CrossEntropyLoss(weight=[no_prob, yes_prob])."""
    if scores.ndim == 3:
        scores = scores[None]
    if labels.ndim == 2:
        labels = labels[None]
    B, C, H, W = scores.shape
    w = jnp.array([no_prob, yes_prob], dtype=jnp.float32)
    s = scores.astype(jnp.float32).reshape(B, C, H * W)
    y = labels.reshape(B, H * W).astype(jnp.int32)
    lse = jax.scipy.special.logsumexp(s, axis=1)                       # (B, HW)
    s_y = jnp.take_along_axis(s, y[:, None, :], axis=1)[:, 0, :]       # (B, HW)
    w_y = w[y]                                                         # (B, HW)
    return jnp.sum(w_y * (lse - s_y)) / jnp.sum(w_y)


@functools.partial(
    jax.jit,
    static_argnames=("no_prob", "yes_prob", "block_positions",
                     "min_kernel_positions"))
def gspade_loss(scores, labels, *, no_prob, yes_prob,
                block_positions=262144, min_kernel_positions=65536):
    """Weighted 2-class cross-entropy (mean reduction), matching GSpadeLoss.forward."""
    if scores.ndim == 3:
        scores = scores[None]
    if labels.ndim == 2:
        labels = labels[None]
    B, C, H, W = scores.shape
    assert C == 2, "GSpadeLoss is a 2-class loss"
    HW = H * W

    # Keep labels in their native integer dtype (no extra HBM cast pass).
    if not jnp.issubdtype(labels.dtype, jnp.integer):
        labels = labels.astype(jnp.int32)

    n_rows = HW // _LANES
    hw_main = n_rows * _LANES
    hw_tail = HW - hw_main

    # Small problems: grid-step + launch overhead dominates; let XLA fuse this.
    if B * HW < min_kernel_positions or n_rows == 0:
        return _reference_loss(scores, labels, no_prob, yes_prob)

    w0 = float(no_prob)
    w1 = float(yes_prob)
    L = _LANES

    # ---- Row-block size: as large as fits the VMEM budget, multiple of 32 so
    #      int8/bf16 packed-sublane tiles stay legal; full extent when small.
    s_item = jnp.dtype(scores.dtype).itemsize
    y_item = jnp.dtype(labels.dtype).itemsize
    per_row = 2 * (C * L * s_item) + 2 * (L * y_item) + 2 * (L * 4)  # dbl-buf + accs
    vmem_row_cap = max(8, _VMEM_BUDGET_BYTES // per_row)
    rows_budget = max(1, min(block_positions // L, vmem_row_cap))
    if n_rows <= rows_budget:
        R = n_rows
    else:
        R = min(n_rows, max(32, _round_down(rows_budget, 32)))
    n_tiles = pl.cdiv(n_rows, R)

    # ---- Second parallel axis so both v7x TensorCores stay busy for B==1/odd B.
    n_outer = 2 if (B % 2 == 1 and n_tiles >= 2) else 1
    n_inner = pl.cdiv(n_tiles, n_outer)
    exact = (n_tiles * R == n_rows) and (n_outer * n_inner == n_tiles)

    # ---- Dense (rows, 128) view of the prefix; <128-element tail in plain JAX.
    if hw_tail == 0:
        s_main = scores.reshape(B, C, n_rows, L)       # free reshapes (contiguous)
        y_main = labels.reshape(B, n_rows, L)
        tail_num = jnp.float32(0.0)
        tail_cnt = jnp.float32(0.0)
    else:
        s_flat = scores.reshape(B, C, HW)
        y_flat = labels.reshape(B, HW)
        s_main = s_flat[:, :, :hw_main].reshape(B, C, n_rows, L)
        y_main = y_flat[:, :hw_main].reshape(B, n_rows, L)
        s_t = s_flat[:, :, hw_main:].astype(jnp.float32)
        y_t = y_flat[:, hw_main:]
        is1 = (y_t == 1)
        s_yt = jnp.where(is1, s_t[:, 1, :], s_t[:, 0, :])
        s_ot = jnp.where(is1, s_t[:, 0, :], s_t[:, 1, :])
        w_yt = jnp.where(is1, jnp.float32(w1), jnp.float32(w0))
        tail_num = jnp.sum(w_yt * _softplus(s_ot - s_yt))
        tail_cnt = jnp.sum(is1.astype(jnp.float32))

    kernel = functools.partial(
        _gspade_loss_kernel,
        w0=w0, w1=w1, hw=hw_main, block_r=R, block_l=L,
        n_inner=n_inner, need_mask=not exact)

    # Clamp the row-block index so the phantom tile of a ragged outer split never
    # requests an out-of-range block; its contributions are masked in-kernel.
    def s_map(b, o, i):
        return (b, 0, jnp.minimum(o * n_inner + i, n_tiles - 1), 0)

    def y_map(b, o, i):
        return (b, jnp.minimum(o * n_inner + i, n_tiles - 1), 0)

    cost = pl.CostEstimate(
        flops=12 * B * hw_main,
        transcendentals=2 * B * hw_main,
        bytes_accessed=B * hw_main * (C * s_item + y_item) + 8 * B * n_outer)

    num, cnt = pl.pallas_call(
        kernel,
        out_shape=(jax.ShapeDtypeStruct((B, n_outer, 1, 1), jnp.float32),
                   jax.ShapeDtypeStruct((B, n_outer, 1, 1), jnp.float32)),
        grid_spec=pltpu.PrefetchScalarGridSpec(
            num_scalar_prefetch=0,
            grid=(B, n_outer, n_inner),
            in_specs=[
                pl.BlockSpec((1, C, R, L), s_map),    # logits tile (native dtype)
                pl.BlockSpec((1, R, L), y_map),       # labels tile (native dtype)
            ],
            out_specs=[
                pl.BlockSpec((1, 1, 1, 1), lambda b, o, i: (b, o, 0, 0)),  # num
                pl.BlockSpec((1, 1, 1, 1), lambda b, o, i: (b, o, 0, 0)),  # count(y==1)
            ],
            scratch_shapes=[
                pltpu.VMEM((R, L), jnp.float32),      # per-lane numerator partials
                pltpu.VMEM((R, L), jnp.float32),      # per-lane ones-count partials
            ],
        ),
        compiler_params=pltpu.CompilerParams(
            dimension_semantics=("parallel", "parallel", "arbitrary"),
        ),
        cost_estimate=cost,
    )(s_main, y_main)

    # Tiny final combine (merges batches, outer groups, megacore partials, tail).
    total_num = jnp.sum(num) + tail_num
    total_cnt = jnp.sum(cnt) + tail_cnt
    den = jnp.float32(w0) * jnp.float32(B * HW) + jnp.float32(w1 - w0) * total_cnt
    return total_num / den


if __name__ == "__main__":
    key = jax.random.PRNGKey(0)
    no_prob, yes_prob = 0.3, 0.7

    # (scores_shape, labels_shape, scores_dtype, labels_dtype, kwargs)
    cases = [
        # dense path, one tile per batch, kernel forced on a small map
        ((2, 2, 16, 16), (2, 16, 16), jnp.float32, jnp.int32,
         dict(min_kernel_positions=0)),
        # B=1: second parallel axis (n_outer=2) + phantom-tile clamp (n_tiles=3)
        ((1, 2, 96, 128), (1, 96, 128), jnp.float32, jnp.int32,
         dict(block_positions=4096, min_kernel_positions=0)),
        # narrow dtypes end-to-end: bf16 scores + int8 labels (no wrapper casts)
        ((2, 2, 32, 128), (2, 32, 128), jnp.bfloat16, jnp.int8,
         dict(min_kernel_positions=0)),
        # 3-D scores / 2-D labels; HW % 128 != 0 -> dense prefix + JAX tail
        ((2, 30, 30), (30, 30), jnp.float32, jnp.int32,
         dict(min_kernel_positions=0)),
        # tiny problem with default threshold -> pure-JAX dispatch path
        ((2, 2, 16, 16), (2, 16, 16), jnp.float32, jnp.int32,
         dict()),
    ]

    for scores_shape, labels_shape, s_dt, y_dt, kw in cases:
        k1, k2, key = jax.random.split(key, 3)
        scores = jax.random.normal(k1, scores_shape, dtype=jnp.float32).astype(s_dt)
        labels = jax.random.randint(k2, labels_shape, 0, 2, dtype=jnp.int32).astype(y_dt)

        loss = jax.block_until_ready(
            gspade_loss(scores, labels, no_prob=no_prob, yes_prob=yes_prob, **kw))
        ref = jax.block_until_ready(
            _reference_loss(scores, labels, no_prob, yes_prob))
        np.testing.assert_allclose(np.asarray(loss), np.asarray(ref),
                                   rtol=5e-5, atol=1e-6)

    print("KERNEL_OK")
</pallas_src>

<mosaic_0001>
module attributes {stable_mosaic.version = 11 : i64} {
  func.func @_gspade_loss_kernel(%arg0: i32, %arg1: i32, %arg2: i32, %arg3: memref<1x2x2x128xf32, #tpu.memory_space<vmem>>, %arg4: memref<1x2x128xi32, #tpu.memory_space<vmem>>, %arg5: memref<1x1x1x1xf32, #tpu.memory_space<vmem>>, %arg6: memref<1x1x1x1xf32, #tpu.memory_space<vmem>>, %arg7: memref<2x128xf32, #tpu.memory_space<vmem>>, %arg8: memref<2x128xf32, #tpu.memory_space<vmem>>) attributes {dimension_semantics = [#tpu.dimension_semantics<parallel>, #tpu.dimension_semantics<parallel>, #tpu.dimension_semantics<arbitrary>], iteration_bounds = array<i64: 2, 1, 1>, scalar_prefetch = 0 : i64, scratch_operands = 2 : i64, tpu.core_type = #tpu.core_type<tc>, window_params = [{transform_indices = @transform_0, window_bounds = array<i64: 1, 2, 2, 128>}, {transform_indices = @transform_1, window_bounds = array<i64: 1, 2, 128>}, {transform_indices = @transform_2, window_bounds = array<i64: 1, 1, 1, 1>}, {transform_indices = @transform_3, window_bounds = array<i64: 1, 1, 1, 1>}]} {
    %c0_i32 = arith.constant 0 : i32
    %0 = arith.cmpi eq, %arg2, %c0_i32 : i32
    %1 = arith.extui %0 : i1 to i32
    %c0_i32_0 = arith.constant 0 : i32
    %2 = arith.cmpi ne, %1, %c0_i32_0 : i32
    scf.if %2 {
      %cst_23 = arith.constant 0.000000e+00 : f32
      %37 = vector.broadcast %cst_23 : f32 to vector<2x128xf32>
      %c0_24 = arith.constant 0 : index
      %c0_25 = arith.constant 0 : index
      %38 = vector.load %arg7[%c0_24, %c0_25] : memref<2x128xf32, #tpu.memory_space<vmem>>, vector<2x128xf32>
      tpu.vector_store %arg7[%c0_24, %c0_25], %37 {strides = array<i32>} : memref<2x128xf32, #tpu.memory_space<vmem>>, vector<2x128xf32>,
      %cst_26 = arith.constant 0.000000e+00 : f32
      %39 = vector.broadcast %cst_26 : f32 to vector<2x128xf32>
      %c0_27 = arith.constant 0 : index
      %c0_28 = arith.constant 0 : index
      %40 = vector.load %arg8[%c0_27, %c0_28] : memref<2x128xf32, #tpu.memory_space<vmem>>, vector<2x128xf32>
      tpu.vector_store %arg8[%c0_27, %c0_28], %39 {strides = array<i32>} : memref<2x128xf32, #tpu.memory_space<vmem>>, vector<2x128xf32>,
    } else {
    }
    %c0 = arith.constant 0 : index
    %c0_1 = arith.constant 0 : index
    %c0_2 = arith.constant 0 : index
    %c0_3 = arith.constant 0 : index
    %3 = vector.load %arg3[%c0, %c0_1, %c0_2, %c0_3] : memref<1x2x2x128xf32, #tpu.memory_space<vmem>>, vector<1x1x2x128xf32>
    %4 = vector.shape_cast %3 : vector<1x1x2x128xf32> to vector<2x128xf32>
    %c0_4 = arith.constant 0 : index
    %c1 = arith.constant 1 : index
    %c0_5 = arith.constant 0 : index
    %c0_6 = arith.constant 0 : index
    %5 = vector.load %arg3[%c0_4, %c1, %c0_5, %c0_6] : memref<1x2x2x128xf32, #tpu.memory_space<vmem>>, vector<1x1x2x128xf32>
    %6 = vector.shape_cast %5 : vector<1x1x2x128xf32> to vector<2x128xf32>
    %c0_7 = arith.constant 0 : index
    %c0_8 = arith.constant 0 : index
    %c0_9 = arith.constant 0 : index
    %7 = vector.load %arg4[%c0_7, %c0_8, %c0_9] : memref<1x2x128xi32, #tpu.memory_space<vmem>>, vector<1x2x128xi32>
    %8 = vector.shape_cast %7 : vector<1x2x128xi32> to vector<2x128xi32>
    %c1_i32 = arith.constant 1 : i32
    %9 = vector.broadcast %c1_i32 : i32 to vector<2x128xi32>
    %10 = arith.cmpi eq, %8, %9 : vector<2x128xi32>
    %11 = arith.select %10, %6, %4 : vector<2x128xi1>, vector<2x128xf32>
    %12 = arith.select %10, %4, %6 : vector<2x128xi1>, vector<2x128xf32>
    %cst = arith.constant 0.699999988 : f32
    %cst_10 = arith.constant 3.000000e-01 : f32
    %13 = vector.broadcast %cst : f32 to vector<2x128xf32>
    %14 = vector.broadcast %cst_10 : f32 to vector<2x128xf32>
    %15 = arith.select %10, %13, %14 : vector<2x128xi1>, vector<2x128xf32>
    %16 = arith.subf %12, %11 : vector<2x128xf32>
    %cst_11 = arith.constant 0.000000e+00 : f32
    %17 = vector.broadcast %cst_11 : f32 to vector<2x128xf32>
    %18 = arith.maximumf %16, %17 : vector<2x128xf32>
    %19 = math.absf %16 : vector<2x128xf32>
    %cst_12 = arith.constant 0.000000e+00 : f32
    %20 = vector.broadcast %cst_12 : f32 to vector<2x128xf32>
    %21 = arith.subf %20, %19 : vector<2x128xf32>
    %22 = math.exp %21 : vector<2x128xf32>
    %23 = math.log1p %22 : vector<2x128xf32>
    %24 = arith.addf %18, %23 : vector<2x128xf32>
    %25 = arith.mulf %15, %24 : vector<2x128xf32>
    %26 = arith.extui %10 : vector<2x128xi1> to vector<2x128xi32>
    %27 = arith.sitofp %26 : vector<2x128xi32> to vector<2x128xf32>
    %c0_13 = arith.constant 0 : index
    %c0_14 = arith.constant 0 : index
    %28 = vector.load %arg7[%c0_13, %c0_14] : memref<2x128xf32, #tpu.memory_space<vmem>>, vector<2x128xf32>
    %29 = arith.addf %28, %25 : vector<2x128xf32>
    %c0_15 = arith.constant 0 : index
    %c0_16 = arith.constant 0 : index
    %30 = vector.load %arg7[%c0_15, %c0_16] : memref<2x128xf32, #tpu.memory_space<vmem>>, vector<2x128xf32>
    tpu.vector_store %arg7[%c0_15, %c0_16], %29 {strides = array<i32>} : memref<2x128xf32, #tpu.memory_space<vmem>>, vector<2x128xf32>,
    %c0_17 = arith.constant 0 : index
    %c0_18 = arith.constant 0 : index
    %31 = vector.load %arg8[%c0_17, %c0_18] : memref<2x128xf32, #tpu.memory_space<vmem>>, vector<2x128xf32>
    %32 = arith.addf %31, %27 : vector<2x128xf32>
    %c0_19 = arith.constant 0 : index
    %c0_20 = arith.constant 0 : index
    %33 = vector.load %arg8[%c0_19, %c0_20] : memref<2x128xf32, #tpu.memory_space<vmem>>, vector<2x128xf32>
    tpu.vector_store %arg8[%c0_19, %c0_20], %32 {strides = array<i32>} : memref<2x128xf32, #tpu.memory_space<vmem>>, vector<2x128xf32>,
    %c0_i32_21 = arith.constant 0 : i32
    %34 = arith.cmpi eq, %arg2, %c0_i32_21 : i32
    %35 = arith.extui %34 : i1 to i32
    %c0_i32_22 = arith.constant 0 : i32
    %36 = arith.cmpi ne, %35, %c0_i32_22 : i32
    scf.if %36 {
      %c0_23 = arith.constant 0 : index
      %c0_24 = arith.constant 0 : index
      %37 = vector.load %arg7[%c0_23, %c0_24] : memref<2x128xf32, #tpu.memory_space<vmem>>, vector<2x128xf32>
      %38 = vector.shape_cast %37 : vector<2x128xf32> to vector<1x2x128xf32>
      %cst_25 = arith.constant dense<0.000000e+00> : vector<1xf32>
      %39 = vector.multi_reduction <add>, %38, %cst_25 [1, 2] : vector<1x2x128xf32> to vector<1xf32>
      %40 = vector.shape_cast %39 : vector<1xf32> to vector<1x1x1xf32>
      %41 = vector.extract %40[0, 0, 0] : f32 from vector<1x1x1xf32>
      %42 = vector.broadcast %41 : f32 to vector<1x1x1x1xf32>
      %c0_26 = arith.constant 0 : index
      %c0_27 = arith.constant 0 : index
      %c0_28 = arith.constant 0 : index
      %c0_29 = arith.constant 0 : index
      %43 = vector.load %arg5[%c0_26, %c0_27, %c0_28, %c0_29] : memref<1x1x1x1xf32, #tpu.memory_space<vmem>>, vector<1x1x1x1xf32>
      tpu.vector_store %arg5[%c0_26, %c0_27, %c0_28, %c0_29], %42 {strides = array<i32>} : memref<1x1x1x1xf32, #tpu.memory_space<vmem>>, vector<1x1x1x1xf32>,
      %c0_30 = arith.constant 0 : index
      %c0_31 = arith.constant 0 : index
      %44 = vector.load %arg8[%c0_30, %c0_31] : memref<2x128xf32, #tpu.memory_space<vmem>>, vector<2x128xf32>
      %45 = vector.shape_cast %44 : vector<2x128xf32> to vector<1x2x128xf32>
      %cst_32 = arith.constant dense<0.000000e+00> : vector<1xf32>
      %46 = vector.multi_reduction <add>, %45, %cst_32 [1, 2] : vector<1x2x128xf32> to vector<1xf32>
      %47 = vector.shape_cast %46 : vector<1xf32> to vector<1x1x1xf32>
      %48 = vector.extract %47[0, 0, 0] : f32 from vector<1x1x1xf32>
      %49 = vector.broadcast %48 : f32 to vector<1x1x1x1xf32>
      %c0_33 = arith.constant 0 : index
      %c0_34 = arith.constant 0 : index
      %c0_35 = arith.constant 0 : index
      %c0_36 = arith.constant 0 : index
      %50 = vector.load %arg6[%c0_33, %c0_34, %c0_35, %c0_36] : memref<1x1x1x1xf32, #tpu.memory_space<vmem>>, vector<1x1x1x1xf32>
      tpu.vector_store %arg6[%c0_33, %c0_34, %c0_35, %c0_36], %49 {strides = array<i32>} : memref<1x1x1x1xf32, #tpu.memory_space<vmem>>, vector<1x1x1x1xf32>,
    } else {
    }
    return
  }
  func.func @transform_0(%arg0: i32, %arg1: i32, %arg2: i32) -> (i32, i32, i32, i32) {
    %c1_i32 = arith.constant 1 : i32
    %0 = arith.muli %arg1, %c1_i32 : i32
    %1 = arith.addi %0, %arg2 : i32
    %c0_i32 = arith.constant 0 : i32
    %2 = arith.minsi %1, %c0_i32 : i32
    %c0_i32_0 = arith.constant 0 : i32
    %c0_i32_1 = arith.constant 0 : i32
    %c0_i32_2 = arith.constant 0 : i32
    return %arg0, %c0_i32_0, %2, %c0_i32_1 : i32, i32, i32, i32
  }
  func.func @transform_1(%arg0: i32, %arg1: i32, %arg2: i32) -> (i32, i32, i32) {
    %c1_i32 = arith.constant 1 : i32
    %0 = arith.muli %arg1, %c1_i32 : i32
    %1 = arith.addi %0, %arg2 : i32
    %c0_i32 = arith.constant 0 : i32
    %2 = arith.minsi %1, %c0_i32 : i32
    %c0_i32_0 = arith.constant 0 : i32
    %c0_i32_1 = arith.constant 0 : i32
    return %arg0, %2, %c0_i32_0 : i32, i32, i32
  }
  func.func @transform_2(%arg0: i32, %arg1: i32, %arg2: i32) -> (i32, i32, i32, i32) {
    %c0_i32 = arith.constant 0 : i32
    %c0_i32_0 = arith.constant 0 : i32
    %c0_i32_1 = arith.constant 0 : i32
    return %arg0, %arg1, %c0_i32, %c0_i32_0 : i32, i32, i32, i32
  }
  func.func @transform_3(%arg0: i32, %arg1: i32, %arg2: i32) -> (i32, i32, i32, i32) {
    %c0_i32 = arith.constant 0 : i32
    %c0_i32_0 = arith.constant 0 : i32
    %c0_i32_1 = arith.constant 0 : i32
    return %arg0, %arg1, %c0_i32, %c0_i32_0 : i32, i32, i32, i32
  }
}

</mosaic_0001>

<llo_original>
// kernel: gspade_loss.1
$region0: #{gspade_loss.1}
  #allocation0 [shape = 'u32[]', space=smem, size = 0x4, offset = 0x4, fixed_abs, tag = 'smem constant byte address 0x4 - core index']
  #allocation1 [shape = 'u32[72,128]{1,0:T(1,128)}', space=vmem, size = 0x9000, scoped, tag = 'internal scratch']
  #allocation2 [shape = 'f32[2,128]{1,0:T(2,128)}', space=vmem, size = 0x400, scoped, tag = 'scratch operand']
  #allocation3 [shape = 'f32[2,128]{1,0:T(2,128)}', space=vmem, size = 0x400, scoped, tag = 'scratch operand']
  %s0 = inlined_call_operand.vmem [shape: f32[2,2,2,128], index: 0, kind: input, shape index: {}]
  %s1 = inlined_call_operand.vmem [shape: s32[2,2,128], index: 1, kind: input, shape index: {}]
  %s2 = inlined_call_operand.vmem [shape: f32[2,1,1,1], index: 2, kind: output, shape index: {0}]
  %s3 = inlined_call_operand.vmem [shape: f32[2,1,1,1], index: 3, kind: output, shape index: {1}]
  %4 = xla_tuple %s2, %s3
  %s5 = sld [smem:[#allocation0]]
  $region57: #{gspade_loss.1} parent=0
    _
  %s7 = ssub.s32 1, %s5
  %s8 = scalar_select 0, %s7, %s5
  loop: start=0, step=1, limit=4
  $region2: #{gspade_loss.1} parent=0 // loop_pre_header
    _
  $region3: #{gspade_loss.1} parent=0 // loop_header
    %s10 = sphi 0, %s14
    %p11 = scmp.ge.s32.totalorder %s10, 4
    %s17 = sphi 0, %s36
    %s18 = sphi 0, %s32
    %s19 = sphi 0, %s28
    %s20 = sphi 0, %s17
    %s21 = sphi 0, %s18
    %s22 = sphi 0, %s19
    %s23 = sphi 0, %s20
    %s24 = sphi 0, %s21
    %s25 = sphi 0, %s22
    %s47 = sphi 0, %s49
    %s50 = sphi 0, %s47
    %s51 = sphi 0, %s50
    %s67 = sphi 0, %s51
    %s81 = sphi 0, %s83
    %s84 = sphi 0, %s81
    %s85 = sphi 0, %s84
    %s101 = sphi 0, %s85
    %s109 = sphi 0, %s111
    %s112 = sphi 0, %s109
    %s113 = sphi 0, %s112
    %s129 = sphi 0, %s113
    %s137 = sphi 0, %s139
    %s140 = sphi 0, %s137
    %s141 = sphi 0, %s140
    %s157 = sphi 0, %s141
  $region4: #{gspade_loss.1} parent=0 // loop_header_branch
    %13 = sbr.rel (%p11) target = $region8
  $region5: #{gspade_loss.1} parent=0 // loop_body
    %s15 = ssub.s32 %s10, 1
    %s16 = ssub.s32 %s10, 2
    %s26 = sadd.s32 1, %s19
    %p27 = scmp.ge.s32.totalorder %s26, 1
    %s28 = scalar_select %p27, 0, %s26
    %s29 = sadd.s32 1, %s18
    %s30 = scalar_select %p27, %s29, %s18
    %p31 = scmp.ge.s32.totalorder %s30, 1
    %s32 = scalar_select %p31, 0, %s30
    %s33 = sadd.s32 1, %s17
    %s34 = scalar_select %p31, %s33, %s17
    %p35 = scmp.ge.s32.totalorder %s34, 2
    %s36 = scalar_select %p35, 0, %s34
    %s37 = sadd.s32 %s18, %s19
    %p38 = scmp.lt.s32.totalorder %s37, 0
    %s39 = scalar_select %p38, %s37, 0
    %s40 = sadd.s32 %s32, %s28
    %p41 = scmp.lt.s32.totalorder %s40, 0
    %s42 = scalar_select %p41, %s40, 0
    %s43 = ssub.s32 %s17, %s36
    %s44 = ssub.s32 %s39, %s42
    %s45 = sor.u32 %s43, %s44
    %p46 = scmp.eq.s32.totalorder %s45, 0
    %s48 = sadd.s32 %s47, 1
    %s49 = scalar_select %p46, %s47, %s48
    %p52 = pneg %p46
    %p53 = scmp.eq.s32.totalorder %s10, 1
    %p54 = por %p52, %p53
    %p55 = scmp.ne.s32.totalorder %s47, %s50
    %p56 = scmp.eq.s32.totalorder %s10, 0
    %p57 = por %p55, %p56
    %p58 = scmp.ne.s32.totalorder %s47, %s50
    %p59 = scmp.eq.s32.totalorder %s15, 1
    %p60 = por %p58, %p59
    %p61 = scmp.ne.s32.totalorder %s50, %s51
    %p62 = scmp.eq.s32.totalorder %s15, 0
    %p63 = por %p61, %p62
    %p64 = scmp.ne.s32.totalorder %s50, %s51
    %p65 = scmp.eq.s32.totalorder %s16, 1
    %p66 = por %p64, %p65
    %p68 = scmp.ne.s32.totalorder %s51, %s67
    %p69 = scmp.eq.s32.totalorder %s16, 0
    %p70 = por %p68, %p69
    %s71 = sadd.s32 %s18, %s19
    %p72 = scmp.lt.s32.totalorder %s71, 0
    %s73 = scalar_select %p72, %s71, 0
    %s74 = sadd.s32 %s32, %s28
    %p75 = scmp.lt.s32.totalorder %s74, 0
    %s76 = scalar_select %p75, %s74, 0
    %s77 = ssub.s32 %s17, %s36
    %s78 = ssub.s32 %s73, %s76
    %s79 = sor.u32 %s77, %s78
    %p80 = scmp.eq.s32.totalorder %s79, 0
    %s82 = sadd.s32 %s81, 1
    %s83 = scalar_select %p80, %s81, %s82
    %p86 = pneg %p80
    %p87 = scmp.eq.s32.totalorder %s10, 1
    %p88 = por %p86, %p87
    %p89 = scmp.ne.s32.totalorder %s81, %s84
    %p90 = scmp.eq.s32.totalorder %s10, 0
    %p91 = por %p89, %p90
    %p92 = scmp.ne.s32.totalorder %s81, %s84
    %p93 = scmp.eq.s32.totalorder %s15, 1
    %p94 = por %p92, %p93
    %p95 = scmp.ne.s32.totalorder %s84, %s85
    %p96 = scmp.eq.s32.totalorder %s15, 0
    %p97 = por %p95, %p96
    %p98 = scmp.ne.s32.totalorder %s84, %s85
    %p99 = scmp.eq.s32.totalorder %s16, 1
    %p100 = por %p98, %p99
    %p102 = scmp.ne.s32.totalorder %s85, %s101
    %p103 = scmp.eq.s32.totalorder %s16, 0
    %p104 = por %p102, %p103
    %s105 = ssub.s32 %s17, %s36
    %s106 = ssub.s32 %s18, %s32
    %s107 = sor.u32 %s105, %s106
    %p108 = scmp.eq.s32.totalorder %s107, 0
    %s110 = sadd.s32 %s109, 1
    %s111 = scalar_select %p108, %s109, %s110
    %p114 = pneg %p108
    %p115 = scmp.eq.s32.totalorder %s10, 1
    %p116 = por %p114, %p115
    %p117 = scmp.ne.s32.totalorder %s109, %s112
    %p118 = scmp.eq.s32.totalorder %s10, 0
    %p119 = por %p117, %p118
    %p120 = scmp.ne.s32.totalorder %s109, %s112
    %p121 = scmp.eq.s32.totalorder %s15, 1
    %p122 = por %p120, %p121
    %p123 = scmp.ne.s32.totalorder %s112, %s113
    %p124 = scmp.eq.s32.totalorder %s15, 0
    %p125 = por %p123, %p124
    %p126 = scmp.ne.s32.totalorder %s112, %s113
    %p127 = scmp.eq.s32.totalorder %s16, 1
    %p128 = por %p126, %p127
    %p130 = scmp.ne.s32.totalorder %s113, %s129
    %p131 = scmp.eq.s32.totalorder %s16, 0
    %p132 = por %p130, %p131
    %s133 = ssub.s32 %s17, %s36
    %s134 = ssub.s32 %s18, %s32
    %s135 = sor.u32 %s133, %s134
    %p136 = scmp.eq.s32.totalorder %s135, 0
    %s138 = sadd.s32 %s137, 1
    %s139 = scalar_select %p136, %s137, %s138
    %p142 = pneg %p136
    %p143 = scmp.eq.s32.totalorder %s10, 1
    %p144 = por %p142, %p143
    %p145 = scmp.ne.s32.totalorder %s137, %s140
    %p146 = scmp.eq.s32.totalorder %s10, 0
    %p147 = por %p145, %p146
    %p148 = scmp.ne.s32.totalorder %s137, %s140
    %p149 = scmp.eq.s32.totalorder %s15, 1
    %p150 = por %p148, %p149
    %p151 = scmp.ne.s32.totalorder %s140, %s141
    %p152 = scmp.eq.s32.totalorder %s15, 0
    %p153 = por %p151, %p152
    %p154 = scmp.ne.s32.totalorder %s140, %s141
    %p155 = scmp.eq.s32.totalorder %s16, 1
    %p156 = por %p154, %p155
    %p158 = scmp.ne.s32.totalorder %s141, %s157
    %p159 = scmp.eq.s32.totalorder %s16, 0
    %p160 = por %p158, %p159
    %p161 = scmp.le.s32.totalorder 1, %s10
    %p162 = scmp.lt.s32.totalorder %s10, 3
    %p163 = pnand %p161, %p162
    %p164 = pneg %p163
    // Predicated region
    $region9: #{gspade_loss.1} parent=5 // pred_check
      _
    $region10: #{gspade_loss.1} parent=5 // pred_check_branch
      %166 = sbr.rel (%p163) target = $region12
    $region11: #{gspade_loss.1} parent=5 // pred_region
      %s167 = ssub.s32 %s10, 1
    $region12: #{gspade_loss.1} parent=5 // pred_fallthru
      _
    %p168 = scmp.lt.s32.totalorder %s10, 2
    // Predicated region
    $region13: #{gspade_loss.1} parent=5 // pred_check
      %p169 = pneg %p168
    $region14: #{gspade_loss.1} parent=5 // pred_check_branch
      %171 = sbr.rel (%p169) target = $region16
    $region15: #{gspade_loss.1} parent=5 // pred_region
      // Predicated region
      $region17: #{gspade_loss.1} parent=15 // pred_check
        %p172 = pneg %p57
      $region18: #{gspade_loss.1} parent=15 // pred_check_branch
        %174 = sbr.rel (%p172) target = $region20
      $region19: #{gspade_loss.1} parent=15 // pred_region
        %s175 = sadd.s32 %s18, %s19
        %p176 = scmp.lt.s32.totalorder %s175, 0
        %s177 = scalar_select %p176, %s175, 0
        %p178 = scmp.lt.s32.totalorder %s17, 1
        %s179 = scalar_select %p178, %s17, 1
        %p180 = scmp.lt.s32.totalorder %s177, 0
        %s181 = scalar_select %p180, %s177, 0
        %s182 = smul.addr %s179, 2
        %s183 = sadd.s32 %s181, %s182
        %s184 = smul.addr %s183, 2
        %s185 = scalar_lea.vmem %s0, %s184
        %s186 = sadd.s32 %s18, %s19
        %p187 = scmp.lt.s32.totalorder %s186, 0
        %s188 = scalar_select %p187, %s186, 0
      $region20: #{gspade_loss.1} parent=15 // pred_fallthru
        _
      // Predicated region
      $region21: #{gspade_loss.1} parent=15 // pred_check
        %p189 = pneg %p91
      $region22: #{gspade_loss.1} parent=15 // pred_check_branch
        %191 = sbr.rel (%p189) target = $region24
      $region23: #{gspade_loss.1} parent=15 // pred_region
        %s192 = sadd.s32 %s18, %s19
        %p193 = scmp.lt.s32.totalorder %s192, 0
        %s194 = scalar_select %p193, %s192, 0
        %p195 = scmp.lt.s32.totalorder %s17, 1
        %s196 = scalar_select %p195, %s17, 1
        %p197 = scmp.lt.s32.totalorder %s194, 0
        %s198 = scalar_select %p197, %s194, 0
        %s199 = sadd.s32 %s198, %s196
        %s200 = smul.addr %s199, 2
        %s201 = scalar_lea.vmem %s1, %s200
        %s202 = sadd.s32 %s18, %s19
        %p203 = scmp.lt.s32.totalorder %s202, 0
        %s204 = scalar_select %p203, %s202, 0
      $region24: #{gspade_loss.1} parent=15 // pred_fallthru
        _
    $region16: #{gspade_loss.1} parent=5 // pred_fallthru
      _
    %p205 = scmp.le.s32.totalorder 1, %s10
    %p206 = scmp.lt.s32.totalorder %s10, 3
    %p207 = pnand %p205, %p206
    %p208 = pneg %p207
    // Predicated region
    $region25: #{gspade_loss.1} parent=5 // pred_check
      _
    $region26: #{gspade_loss.1} parent=5 // pred_check_branch
      %210 = sbr.rel (%p207) target = $region28
    $region27: #{gspade_loss.1} parent=5 // pred_region
      %s211 = ssub.s32 %s10, 1
      %s212 = sadd.s32 %s21, %s22
      %p213 = scmp.lt.s32.totalorder %s212, 0
      %s214 = scalar_select %p213, %s212, 0
      %p215 = scmp.lt.s32.totalorder %s20, 1
      %s216 = scalar_select %p215, %s20, 1
      %p217 = scmp.lt.s32.totalorder %s214, 0
      %s218 = scalar_select %p217, %s214, 0
      %s219 = smul.addr %s216, 2
      %s220 = sadd.s32 %s218, %s219
      %s221 = smul.addr %s220, 2
      %s222 = scalar_lea.vmem %s0, %s221
      %p223 = pneg %p63
      %p224 = pneg %p60
      %s225 = sadd.s32 %s21, %s22
      %p226 = scmp.lt.s32.totalorder %s225, 0
      %s227 = scalar_select %p226, %s225, 0
      %p228 = scmp.lt.s32.totalorder %s20, 1
      %s229 = scalar_select %p228, %s20, 1
      %p230 = scmp.lt.s32.totalorder %s227, 0
      %s231 = scalar_select %p230, %s227, 0
      %s232 = sadd.s32 %s231, %s229
      %s233 = smul.addr %s232, 2
      %s234 = scalar_lea.vmem %s1, %s233
      %p235 = pneg %p97
      %p236 = pneg %p94
      %p237 = pneg %p125
      %p238 = pneg %p122
      %p239 = scmp.lt.s32.totalorder %s20, 1
      %s240 = scalar_select %p239, %s20, 1
      %p241 = scmp.lt.s32.totalorder %s21, 0
      %s242 = scalar_select %p241, %s21, 0
      %s243 = sadd.s32 %s242, %s240
      %s244 = scalar_lea.vmem %s2, %s243
      %p245 = pneg %p153
      %p246 = pneg %p150
      %p247 = scmp.lt.s32.totalorder %s20, 1
      %s248 = scalar_select %p247, %s20, 1
      %p249 = scmp.lt.s32.totalorder %s21, 0
      %s250 = scalar_select %p249, %s21, 0
      %s251 = sadd.s32 %s250, %s248
      %s252 = scalar_lea.vmem %s3, %s251
      %s253 = sadd.s32 %s21, %s22
      %p254 = scmp.lt.s32.totalorder %s253, 0
      %s255 = scalar_select %p254, %s253, 0
      %p256 = scmp.lt.s32.totalorder %s20, 1
      %s257 = scalar_select %p256, %s20, 1
      %p258 = scmp.lt.s32.totalorder %s255, 0
      %s259 = scalar_select %p258, %s255, 0
      %s260 = smul.addr %s257, 2
      %s261 = sadd.s32 %s259, %s260
      %s262 = smul.addr %s261, 2
      %s263 = scalar_lea.vmem %s0, %s262
      %s264 = sadd.s32 %s21, %s22
      %p265 = scmp.lt.s32.totalorder %s264, 0
      %s266 = scalar_select %p265, %s264, 0
      %s267 = sadd.s32 %s21, %s22
      %p268 = scmp.lt.s32.totalorder %s267, 0
      %s269 = scalar_select %p268, %s267, 0
      %p270 = scmp.lt.s32.totalorder %s20, 1
      %s271 = scalar_select %p270, %s20, 1
      %p272 = scmp.lt.s32.totalorder %s269, 0
      %s273 = scalar_select %p272, %s269, 0
      %s274 = sadd.s32 %s273, %s271
      %s275 = smul.addr %s274, 2
      %s276 = scalar_lea.vmem %s1, %s275
      %s277 = sadd.s32 %s21, %s22
      %p278 = scmp.lt.s32.totalorder %s277, 0
      %s279 = scalar_select %p278, %s277, 0
      %p280 = scmp.lt.s32.totalorder %s20, 1
      %s281 = scalar_select %p280, %s20, 1
      %p282 = scmp.lt.s32.totalorder %s21, 0
      %s283 = scalar_select %p282, %s21, 0
      %s284 = sadd.s32 %s283, %s281
      %s285 = scalar_lea.vmem %s2, %s284
      %p286 = scmp.lt.s32.totalorder %s20, 1
      %s287 = scalar_select %p286, %s20, 1
      %p288 = scmp.lt.s32.totalorder %s21, 0
      %s289 = scalar_select %p288, %s21, 0
      %s290 = sadd.s32 %s289, %s287
      %s291 = scalar_lea.vmem %s3, %s290
      %p292 = scmp.eq.s32.totalorder %s22, 0
      // Predicated region
      $region29: #{gspade_loss.1} parent=27 // pred_check
        %p293 = pneg %p292
      $region30: #{gspade_loss.1} parent=27 // pred_check_branch
        %295 = sbr.rel (%p293) target = $region32
      $region31: #{gspade_loss.1} parent=27 // pred_region
        %296 = vst [vmem:[#allocation2] sm:$0x3] 0.0
        %297 = vst [vmem:[#allocation3] sm:$0x3] 0.0
      $region32: #{gspade_loss.1} parent=27 // pred_fallthru
        _
      %v298 = vld [vmem:[%s263] sm:$0x3]
      %s299 = scalar_lea.vmem %s263, 2
      %v300 = vld [vmem:[%s299] sm:$0x3]
      %v301 = vld [vmem:[%s276] sm:$0x3]
      %vm302 = vcmp.eq.s32.totalorder %v301, 1
      %v303 = vsel %vm302, %v300, %v298
      %v304 = vsel %vm302, %v298, %v300
      %v305 = vsel %vm302, 0.7, 0.3
      %v306 = vsub.f32 %v304, %v303
      %v307 = vmax.f32 %v306, 0.0
      %v308 = vand.u32 2147483647, %v306
      %v309 = vsub.f32 0.0, %v308
      %v310 = vmul.f32 %v309, 1.442695
      %v311 = vpow.pop %v310
      %v312 = vadd.f32 %v311, 1.0
      %v313 = vlog2.pop %v312
      %v314 = vmul.f32 %v313, 0.6931472
      %v315 = vmul.f32 -0.5, %v311
      %v316 = vadd.f32 %v315, 1.0
      %v317 = vmul.f32 %v316, %v311
      %v318 = vand.u32 2147483647, %v311
      %vm319 = vcmp.lt.f32.partialorder %v318, 0.0004427343
      %v320 = vsel %vm319, %v317, %v314
      %v321 = vadd.f32 %v307, %v320
      %v322 = vmul.f32 %v305, %v321
      %v323 = vsel %vm302, 1, 0
      %v324 = vcvt.s32.f32 %v323
      %v325 = vld [vmem:[#allocation2] sm:$0x3]
      %v326 = vadd.f32 %v325, %v322
      %327 = vst [vmem:[#allocation2] sm:$0x3] %v326
      %v328 = vld [vmem:[#allocation3] sm:$0x3]
      %v329 = vadd.f32 %v328, %v324
      %330 = vst [vmem:[#allocation3] sm:$0x3] %v329
      // Predicated region
      $region33: #{gspade_loss.1} parent=27 // pred_check
        %p331 = pneg %p292
      $region34: #{gspade_loss.1} parent=27 // pred_check_branch
        %333 = sbr.rel (%p331) target = $region36
      $region35: #{gspade_loss.1} parent=27 // pred_region
        %v334 = vld [vmem:[#allocation2] sm:$0x3]
        %vm335 = vcmask 1041408
        %v336 = vsel %vm335, %v334, 0.0
        %337 = vadd.xlane.f32.xlu0 %v336
        %v338 = vpop.xlane.xlu0 %337
        %v339 = vrot.slane %v338, 4
        %v340 = vadd.f32 %v338, %v339
        %v341 = vrot.slane %v340, 2
        %v342 = vadd.f32 %v340, %v341
        %v343 = vrot.slane %v342, 1
        %v344 = vadd.f32 %v342, %v343
        %s345 = vtos %v344
        %v346 = vstv %s345
        %vm347 = vcmask 0
        %348 = vst.msk [vmem:[%s285] sm:$0x1] %vm347, %v346
        %v349 = vld [vmem:[#allocation3] sm:$0x3]
        %v350 = vsel %vm335, %v349, 0.0
        %351 = vadd.xlane.f32.xlu0 %v350
        %v352 = vpop.xlane.xlu0 %351
        %v353 = vrot.slane %v352, 4
        %v354 = vadd.f32 %v352, %v353
        %v355 = vrot.slane %v354, 2
        %v356 = vadd.f32 %v354, %v355
        %v357 = vrot.slane %v356, 1
        %v358 = vadd.f32 %v356, %v357
        %s359 = vtos %v358
        %v360 = vstv %s359
        %361 = vst.msk [vmem:[%s291] sm:$0x1] %vm347, %v360
      $region36: #{gspade_loss.1} parent=27 // pred_fallthru
        _
      %p362 = scmp.lt.s32.totalorder %s20, 1
      %s363 = scalar_select %p362, %s20, 1
      %p364 = scmp.lt.s32.totalorder %s21, 0
      %s365 = scalar_select %p364, %s21, 0
      %s366 = sadd.s32 %s365, %s363
      %s367 = scalar_lea.vmem %s2, %s366
      %p368 = scmp.lt.s32.totalorder %s20, 1
      %s369 = scalar_select %p368, %s20, 1
      %p370 = scmp.lt.s32.totalorder %s21, 0
      %s371 = scalar_select %p370, %s21, 0
      %s372 = sadd.s32 %s371, %s369
      %s373 = scalar_lea.vmem %s3, %s372
      // Predicated region
      $region37: #{gspade_loss.1} parent=27 // pred_check
        %p374 = pneg %p122
      $region38: #{gspade_loss.1} parent=27 // pred_check_branch
        %376 = sbr.rel (%p374) target = $region40
      $region39: #{gspade_loss.1} parent=27 // pred_region
        _
      $region40: #{gspade_loss.1} parent=27 // pred_fallthru
        _
      // Predicated region
      $region41: #{gspade_loss.1} parent=27 // pred_check
        %p377 = pneg %p150
      $region42: #{gspade_loss.1} parent=27 // pred_check_branch
        %379 = sbr.rel (%p377) target = $region44
      $region43: #{gspade_loss.1} parent=27 // pred_region
        _
      $region44: #{gspade_loss.1} parent=27 // pred_fallthru
        _
    $region28: #{gspade_loss.1} parent=5 // pred_fallthru
      _
    %p380 = scmp.le.s32.totalorder 2, %s10
    // Predicated region
    $region45: #{gspade_loss.1} parent=5 // pred_check
      %p381 = pneg %p380
    $region46: #{gspade_loss.1} parent=5 // pred_check_branch
      %383 = sbr.rel (%p381) target = $region48
    $region47: #{gspade_loss.1} parent=5 // pred_region
      %s384 = ssub.s32 %s10, 2
      // Predicated region
      $region49: #{gspade_loss.1} parent=47 // pred_check
        %p385 = pneg %p128
      $region50: #{gspade_loss.1} parent=47 // pred_check_branch
        %387 = sbr.rel (%p385) target = $region52
      $region51: #{gspade_loss.1} parent=47 // pred_region
        %p388 = scmp.lt.s32.totalorder %s23, 1
        %s389 = scalar_select %p388, %s23, 1
        %p390 = scmp.lt.s32.totalorder %s24, 0
        %s391 = scalar_select %p390, %s24, 0
        %s392 = sadd.s32 %s391, %s389
        %s393 = scalar_lea.vmem %s2, %s392
      $region52: #{gspade_loss.1} parent=47 // pred_fallthru
        _
      // Predicated region
      $region53: #{gspade_loss.1} parent=47 // pred_check
        %p394 = pneg %p156
      $region54: #{gspade_loss.1} parent=47 // pred_check_branch
        %396 = sbr.rel (%p394) target = $region56
      $region55: #{gspade_loss.1} parent=47 // pred_region
        %p397 = scmp.lt.s32.totalorder %s23, 1
        %s398 = scalar_select %p397, %s23, 1
        %p399 = scmp.lt.s32.totalorder %s24, 0
        %s400 = scalar_select %p399, %s24, 0
        %s401 = sadd.s32 %s400, %s398
        %s402 = scalar_lea.vmem %s3, %s401
      $region56: #{gspade_loss.1} parent=47 // pred_fallthru
        _
    $region48: #{gspade_loss.1} parent=5 // pred_fallthru
      _
  $region6: #{gspade_loss.1} parent=0 // loop_footer
    %s14 = sadd.s32 1, %s10
  $region7: #{gspade_loss.1} parent=0 // loop_footer_branch
    %9 = sbr.rel target = $region3
  $region8: #{gspade_loss.1} parent=0 // loop_exit
    _

</llo_original>
